<compile_context>
chip_gen: v7x
topology: tpu7x:2x2x1
jax: 0.10.0
libtpu: 0.0.40
codegen_flags: <defaults>
</compile_context>

<pallas_src>
import functools

import jax
import jax.numpy as jnp
from jax.experimental import pallas as pl
from jax.experimental.pallas import tpu as pltpu


def _round_up(x, m):
    return (x + m - 1) // m * m


def _contrastive_loss_kernel(o1_ref, o2_ref, lbl_ref, out_ref, *,
                             margin, eps, batch, tile_b, mask_rows):
    i = pl.program_id(0)

    # Inputs arrive in their native dtype (bf16/f32/...); cast after the load so
    # the HBM->VMEM DMA moves the narrow dtype.
    o1 = o1_ref[...].astype(jnp.float32)
    o2 = o2_ref[...].astype(jnp.float32)
    lbl = lbl_ref[...].astype(jnp.float32)

    # F.pairwise_distance(x1, x2, p=2, eps=1e-6, keepdim=True):
    #   dist = || x1 - x2 + eps ||_2 along the feature axis, shape (TB, 1).
    # No wrapper-side feature padding -> no column mask needed.
    diff = o1 - o2 + eps
    sq_dist = jnp.sum(diff * diff, axis=-1, keepdims=True)       # (TB, 1)
    dist = jnp.sqrt(sq_dist)                                      # (TB, 1)

    # (1 - label) * dist^2 + label * clamp(margin - dist, min=0)^2
    # Positive term uses sq_dist directly (keeps sqrt-then-square rounding off
    # that path; deliberate last-ulp deviation from the torch reference).
    pos_term = (1.0 - lbl) * sq_dist
    neg_term = lbl * jnp.square(jnp.maximum(margin - dist, 0.0))
    per_pair = pos_term + neg_term                                # (TB, 1)

    def _write(partial):
        # Broadcast the scalar partial across the lane-dense (1, 8, 128) block
        # (unmasked vst); the wrapper reads [:, 0, 0].
        out_ref[...] = jnp.zeros(out_ref.shape, jnp.float32) + partial

    if mask_rows:
        last = pl.num_programs(0) - 1

        @pl.when(i != last)
        def _():
            _write(jnp.sum(per_pair))

        @pl.when(i == last)
        def _():
            # Only the final block overhangs the real batch; mask those rows
            # AFTER all math (select does not propagate NaN/Inf coming from the
            # undefined rows of the partially-valid block).
            row = (jax.lax.broadcasted_iota(jnp.int32, per_pair.shape, 0)
                   + i * tile_b)
            _write(jnp.sum(jnp.where(row < batch, per_pair, 0.0)))
    else:
        _write(jnp.sum(per_pair))


def contrastive_loss(output1, output2, label, *, margin=2.0, eps=1e-6):
    """Pallas TPU implementation of ContrastiveLoss.forward."""
    assert output1.shape == output2.shape and output1.ndim == 2
    b, d = output1.shape
    assert label.shape == (b, 1)

    itemsize = jnp.dtype(output1.dtype).itemsize
    d_lane = _round_up(d, 128)   # VMEM buffers are lane-padded even though the
                                 # HBM block uses the raw (tb, d) extent.

    # Per-generation VMEM budget with headroom for the f32 compute temporaries.
    try:
        info = pltpu.get_tpu_info()
        vmem_cap = int(getattr(info, "vmem_capacity_bytes", 64 << 20))
    except Exception:
        vmem_cap = 64 << 20
    budget = min(vmem_cap // 2, 64 << 20)        # v5e/v6e ~64 MiB, v7x ~32 MiB
    vmem_limit = int(max(min(vmem_cap - (8 << 20), budget + (16 << 20)),
                         16 << 20))

    bytes_per_row = (4 * d_lane * itemsize       # 2 inputs x 2 pipeline buffers
                     + 3 * d_lane * 4            # f32 temporaries (diff, sq, ..)
                     + 2 * 128 * 4)              # label double-buffer, lane-pad
    tb = (budget // bytes_per_row) // 8 * 8
    tb = int(max(8, min(tb, _round_up(b, 8), 32768)))
    # TODO(synk): for extremely wide D (one 8-row tile + f32 temps ~ the VMEM
    # budget, mainly a v7x 64 MiB concern), add a feature-axis grid dimension
    # and accumulate sq_dist across D-tiles before the sqrt/hinge.

    grid = pl.cdiv(b, tb)
    mask_rows = (grid * tb) != b

    kernel = functools.partial(
        _contrastive_loss_kernel, margin=margin, eps=eps, batch=b,
        tile_b=tb, mask_rows=mask_rows)

    partials = pl.pallas_call(
        kernel,
        out_shape=jax.ShapeDtypeStruct((grid, 8, 128), jnp.float32),
        grid_spec=pltpu.PrefetchScalarGridSpec(
            num_scalar_prefetch=0,
            grid=(grid,),
            in_specs=[
                # Full feature extent as the last block dim (legal even when
                # D % 128 != 0) -> no wrapper-side jnp.pad / extra HBM copy.
                pl.BlockSpec((tb, d), lambda i: (i, 0)),
                pl.BlockSpec((tb, d), lambda i: (i, 0)),
                pl.BlockSpec((tb, 1), lambda i: (i, 0)),
            ],
            # One lane-dense partial-sum block per tile: no carried accumulator,
            # so the batch axis can be "parallel" (splits across v7x's 2 TCs).
            out_specs=pl.BlockSpec((1, 8, 128), lambda i: (i, 0, 0)),
        ),
        compiler_params=pltpu.CompilerParams(
            dimension_semantics=("parallel",),
            vmem_limit_bytes=vmem_limit),
    )(output1, output2, label)

    # torch.mean over all (B, 1) elements -> scalar; tiny wrapper-side reduce.
    return jnp.sum(partials[:, 0, 0]) * (1.0 / b)


def _reference(output1, output2, label, margin=2.0, eps=1e-6):
    diff = output1 - output2 + eps
    dist = jnp.sqrt(jnp.sum(diff * diff, axis=-1, keepdims=True))
    per = (1.0 - label) * dist ** 2 + label * jnp.maximum(margin - dist, 0.0) ** 2
    return jnp.mean(per)


if __name__ == "__main__":
    key = jax.random.PRNGKey(0)
    k1, k2, k3 = jax.random.split(key, 3)

    B, D = 8, 32  # small embedding batch from the siamese network
    output1 = jax.random.normal(k1, (B, D), dtype=jnp.float32)
    output2 = jax.random.normal(k2, (B, D), dtype=jnp.float32)
    label = jax.random.bernoulli(k3, 0.5, (B, 1)).astype(jnp.float32)

    loss = contrastive_loss(output1, output2, label, margin=2.0)
    jax.block_until_ready(loss)

    ref = _reference(output1, output2, label, margin=2.0)
    assert jnp.allclose(loss, ref, rtol=1e-5, atol=1e-5), (loss, ref)

    print("KERNEL_OK")
</pallas_src>

<mosaic_0001>
module attributes {stable_mosaic.version = 11 : i64} {
  func.func @_contrastive_loss_kernel(%arg0: i32, %arg1: memref<8x32xf32, #tpu.memory_space<vmem>>, %arg2: memref<8x32xf32, #tpu.memory_space<vmem>>, %arg3: memref<8x1xf32, #tpu.memory_space<vmem>>, %arg4: memref<1x8x128xf32, #tpu.memory_space<vmem>>) attributes {dimension_semantics = [#tpu.dimension_semantics<parallel>], iteration_bounds = array<i64: 1>, scalar_prefetch = 0 : i64, scratch_operands = 0 : i64, tpu.core_type = #tpu.core_type<tc>, window_params = [{transform_indices = @transform_0, window_bounds = array<i64: 8, 32>}, {transform_indices = @transform_1, window_bounds = array<i64: 8, 32>}, {transform_indices = @transform_2, window_bounds = array<i64: 8, 1>}, {transform_indices = @transform_3, window_bounds = array<i64: 1, 8, 128>}]} {
    %c0 = arith.constant 0 : index
    %c0_0 = arith.constant 0 : index
    %0 = vector.load %arg1[%c0, %c0_0] : memref<8x32xf32, #tpu.memory_space<vmem>>, vector<8x32xf32>
    %c0_1 = arith.constant 0 : index
    %c0_2 = arith.constant 0 : index
    %1 = vector.load %arg2[%c0_1, %c0_2] : memref<8x32xf32, #tpu.memory_space<vmem>>, vector<8x32xf32>
    %c0_3 = arith.constant 0 : index
    %c0_4 = arith.constant 0 : index
    %2 = vector.load %arg3[%c0_3, %c0_4] : memref<8x1xf32, #tpu.memory_space<vmem>>, vector<8x1xf32>
    %3 = arith.subf %0, %1 : vector<8x32xf32>
    %cst = arith.constant 9.99999997E-7 : f32
    %4 = vector.broadcast %cst : f32 to vector<8x32xf32>
    %5 = arith.addf %3, %4 : vector<8x32xf32>
    %6 = arith.mulf %5, %5 : vector<8x32xf32>
    %cst_5 = arith.constant dense<0.000000e+00> : vector<8xf32>
    %7 = vector.multi_reduction <add>, %6, %cst_5 [1] : vector<8x32xf32> to vector<8xf32>
    %8 = vector.shape_cast %7 : vector<8xf32> to vector<8x1xf32>
    %9 = math.sqrt %8 : vector<8x1xf32>
    %cst_6 = arith.constant 1.000000e+00 : f32
    %10 = vector.broadcast %cst_6 : f32 to vector<8x1xf32>
    %11 = arith.subf %10, %2 : vector<8x1xf32>
    %12 = arith.mulf %11, %8 : vector<8x1xf32>
    %cst_7 = arith.constant 2.000000e+00 : f32
    %13 = vector.broadcast %cst_7 : f32 to vector<8x1xf32>
    %14 = arith.subf %13, %9 : vector<8x1xf32>
    %cst_8 = arith.constant 0.000000e+00 : f32
    %15 = vector.broadcast %cst_8 : f32 to vector<8x1xf32>
    %16 = arith.maximumf %14, %15 : vector<8x1xf32>
    %17 = arith.mulf %16, %16 : vector<8x1xf32>
    %18 = arith.mulf %2, %17 : vector<8x1xf32>
    %19 = arith.addf %12, %18 : vector<8x1xf32>
    %20 = vector.shape_cast %19 : vector<8x1xf32> to vector<1x8x1xf32>
    %cst_9 = arith.constant dense<0.000000e+00> : vector<1xf32>
    %21 = vector.multi_reduction <add>, %20, %cst_9 [1, 2] : vector<1x8x1xf32> to vector<1xf32>
    %22 = vector.shape_cast %21 : vector<1xf32> to vector<1x1x1xf32>
    %23 = vector.extract %22[0, 0, 0] : f32 from vector<1x1x1xf32>
    %cst_10 = arith.constant 0.000000e+00 : f32
    %24 = vector.broadcast %cst_10 : f32 to vector<1x8x128xf32>
    %25 = vector.broadcast %23 : f32 to vector<1x8x128xf32>
    %26 = arith.addf %24, %25 : vector<1x8x128xf32>
    %c0_11 = arith.constant 0 : index
    %c0_12 = arith.constant 0 : index
    %c0_13 = arith.constant 0 : index
    %27 = vector.load %arg4[%c0_11, %c0_12, %c0_13] : memref<1x8x128xf32, #tpu.memory_space<vmem>>, vector<1x8x128xf32>
    tpu.vector_store %arg4[%c0_11, %c0_12, %c0_13], %26 {strides = array<i32>} : memref<1x8x128xf32, #tpu.memory_space<vmem>>, vector<1x8x128xf32>,
    return
  }
  func.func @transform_0(%arg0: i32) -> (i32, i32) {
    %c0_i32 = arith.constant 0 : i32
    %c0_i32_0 = arith.constant 0 : i32
    return %arg0, %c0_i32 : i32, i32
  }
  func.func @transform_1(%arg0: i32) -> (i32, i32) {
    %c0_i32 = arith.constant 0 : i32
    %c0_i32_0 = arith.constant 0 : i32
    return %arg0, %c0_i32 : i32, i32
  }
  func.func @transform_2(%arg0: i32) -> (i32, i32) {
    %c0_i32 = arith.constant 0 : i32
    %c0_i32_0 = arith.constant 0 : i32
    return %arg0, %c0_i32 : i32, i32
  }
  func.func @transform_3(%arg0: i32) -> (i32, i32, i32) {
    %c0_i32 = arith.constant 0 : i32
    %c0_i32_0 = arith.constant 0 : i32
    %c0_i32_1 = arith.constant 0 : i32
    return %arg0, %c0_i32, %c0_i32_0 : i32, i32, i32
  }
}

</mosaic_0001>

<llo_original>
// kernel: tpu_custom_call.1
$region0: #{tpu_custom_call.1}
  #allocation0 [shape = 'u32[]', space=smem, size = 0x4, offset = 0x4, fixed_abs, tag = 'smem constant byte address 0x4 - core index']
  #allocation1 [shape = 'u32[144,128]{1,0:T(1,128)}', space=vmem, size = 0x12000, scoped, tag = 'internal scratch']
  %s0 = inlined_call_operand.vmem [shape: f32[8,32], index: 0, kind: input, shape index: {}]
  %s1 = inlined_call_operand.hbm [shape: f32[8,32], index: 1, kind: input, shape index: {}]
  %s2 = inlined_call_operand.vmem [shape: f32[8,1], index: 2, kind: input, shape index: {}]
  %s3 = inlined_call_operand.hbm [shape: f32[1,8,128], index: 3, kind: output, shape index: {}]
  %s4 = sld [smem:[#allocation0]]
  $region26: #{tpu_custom_call.1} parent=0
    _
  %s6 = ssub.s32 1, %s4
  %s7 = scalar_select 0, %s6, %s4
  $region1: #{tpu_custom_call.1} parent=0
    #allocation2 [shape = 'u8[4096]{0}', space=vmem, size = 0x1000, scoped, tag = 'input window, operand 1, single buffered']
    #allocation3 [shape = 's32[1]{0}', space=sflag, size = 0x4, scoped, tag = 'scoped memory for tpu_custom_call.1']
    #allocation4 [shape = 's32[1]{0}', space=sflag, size = 0x4, scoped, tag = 'scoped memory for tpu_custom_call.1']
    #allocation5 [shape = 'u8[4096]{0}', space=vmem, size = 0x1000, scoped, tag = 'output window, operand 0, single buffered']
    %8 = vsyncpa [#allocation3], 0
    %9 = vsyncpa [#allocation4], 0
    // Predicated region
    $region2: #{tpu_custom_call.1} parent=1 // pred_check
      _
    $region3: #{tpu_custom_call.1} parent=1 // pred_check_branch
      %11 = sbr.rel (0) target = $region5
    $region4: #{tpu_custom_call.1} parent=1 // pred_region
      _
    $region5: #{tpu_custom_call.1} parent=1 // pred_fallthru
      _
    // Predicated region
    $region6: #{tpu_custom_call.1} parent=1 // pred_check
      _
    $region7: #{tpu_custom_call.1} parent=1 // pred_check_branch
      %13 = sbr.rel (0) target = $region9
    $region8: #{tpu_custom_call.1} parent=1 // pred_region
      %s15 = ssub.s32 128, 128
      %16 = vsyncadd [#allocation3], %s15
      %s18 = sshll.u32 [#allocation2], 4
      %s19 = int_to_ptr.vmem [resolvable:$true] %s18
      %21 = dma.hbm_to_vmem [thread:$0]  %s1, 128, %s19, [#allocation3]
    $region9: #{tpu_custom_call.1} parent=1 // pred_fallthru
      _
    // Predicated region
    $region10: #{tpu_custom_call.1} parent=1 // pred_check
      _
    $region11: #{tpu_custom_call.1} parent=1 // pred_check_branch
      %23 = sbr.rel (0) target = $region13
    $region12: #{tpu_custom_call.1} parent=1 // pred_region
      _
    $region13: #{tpu_custom_call.1} parent=1 // pred_fallthru
      _
    // Predicated region
    $region14: #{tpu_custom_call.1} parent=1 // pred_check
      _
    $region15: #{tpu_custom_call.1} parent=1 // pred_check_branch
      %25 = sbr.rel (0) target = $region17
    $region16: #{tpu_custom_call.1} parent=1 // pred_region
      %26 = dma.done [#allocation3], 128
    $region17: #{tpu_custom_call.1} parent=1 // pred_fallthru
      _
    %v27 = vld [vmem:[%s0] sm:$0xff]
    %v28 = vld [vmem:[#allocation2] sm:$0xff]
    %v29 = vld [vmem:[%s2] sm:$0xff]
    %v30 = vsub.f32 %v27, %v28
    %v31 = vadd.f32 %v30, 1e-06
    %v32 = vmul.f32 %v31, %v31
    %vm33 = vcmask 261120
    %v34 = vsel %vm33, %v32, 0.0
    %35 = vadd.xlane.f32.xlu0 %v34
    %v36 = vpop.xlane.xlu0 %35
    %v37 = vrsqrt.pop %v36
    %v38 = vmul.f32 %v36, %v37
    %vm39 = vcmp.eq.f32.partialorder %v36, inf
    %v40 = vsel %vm39, %v36, %v38
    %vm41 = vcmp.eq.f32.partialorder %v36, 0.0
    %v42 = vand.u32 %v36, 2147483648
    %v43 = vsel %vm41, %v42, %v40
    %v44 = vsub.f32 1.0, %v29
    %v45 = vmul.f32 %v44, %v36
    %v46 = vsub.f32 2.0, %v43
    %v47 = vmax.f32 %v46, 0.0
    %v48 = vmul.f32 %v47, %v47
    %v49 = vmul.f32 %v29, %v48
    %v50 = vadd.f32 %v45, %v49
    %vm51 = vcmask 7168
    %v52 = vsel %vm51, %v50, 0.0
    %53 = vadd.xlane.f32.xlu0 %v52
    %v54 = vpop.xlane.xlu0 %53
    %v55 = vrot.slane %v54, 4
    %v56 = vadd.f32 %v54, %v55
    %v57 = vrot.slane %v56, 2
    %v58 = vadd.f32 %v56, %v57
    %v59 = vrot.slane %v58, 1
    %v60 = vadd.f32 %v58, %v59
    %s61 = vtos %v60
    %v62 = vstv %s61
    %v63 = vadd.f32 %v62, 0.0
    %64 = vst [vmem:[#allocation5] sm:$0xff] %v63
    // Predicated region
    $region18: #{tpu_custom_call.1} parent=1 // pred_check
      _
    $region19: #{tpu_custom_call.1} parent=1 // pred_check_branch
      %66 = sbr.rel (0) target = $region21
    $region20: #{tpu_custom_call.1} parent=1 // pred_region
      %s68 = ssub.s32 128, 128
      %69 = vsyncadd [#allocation4], %s68
      %s71 = sshll.u32 [#allocation5], 4
      %s72 = int_to_ptr.vmem [resolvable:$true] %s71
      %74 = dma.vmem_to_hbm [thread:$0]  %s72, 128, %s3, [#allocation4]
    $region21: #{tpu_custom_call.1} parent=1 // pred_fallthru
      _
    // Predicated region
    $region22: #{tpu_custom_call.1} parent=1 // pred_check
      _
    $region23: #{tpu_custom_call.1} parent=1 // pred_check_branch
      %76 = sbr.rel (0) target = $region25
    $region24: #{tpu_custom_call.1} parent=1 // pred_region
      %77 = dma.done [#allocation4], 128
    $region25: #{tpu_custom_call.1} parent=1 // pred_fallthru
      _
    %78 = vsyncpa [#allocation3], 1
    %79 = vsyncpa [#allocation4], 1

</llo_original>
